<compile_context>
chip_gen: v7x
topology: tpu7x:2x2x1
jax: 0.10.0
libtpu: 0.0.40
codegen_flags: <defaults>
</compile_context>

<pallas_src>
import functools

import jax
import jax.numpy as jnp
from jax import lax
from jax.experimental import pallas as pl
from jax.experimental.pallas import tpu as pltpu


def _norm_relu_kernel(bias_ref, x_ref, o_ref, *, enable):
    # x_ref / o_ref: (NB, C_total, TS) VMEM blocks; bias_ref: (nbias,) float32 in SMEM.
    begin1 = 0
    begin2 = 0
    for d, on in enable:
        xg = x_ref[:, begin1:begin1 + d, :]                      # (NB, d, TS), static slice
        if on:
            b = bias_ref[begin2]                                 # scalar read from SMEM
            xf = xg.astype(jnp.float32)                          # f32 accumulation (no-op for f32 in)
            norm2 = jnp.sum(xf * xf, axis=1, keepdims=True)      # (NB, 1, TS)
            # relu(norm - b)/norm == relu(1 - b/norm)  (norm > 0); fused into a single
            # EUP pass via rsqrt.  eps on norm^2 keeps the zero-input case finite.
            ratio = jnp.maximum(1.0 - b * lax.rsqrt(norm2 + 1e-16), 0.0)
            o_ref[:, begin1:begin1 + d, :] = (xf * ratio).astype(o_ref.dtype)
            begin2 += 1
        else:
            o_ref[:, begin1:begin1 + d, :] = xg                  # pass-through group
        begin1 += d


def _plan_tiles(N, C, S, itemsize):
    """Pick (batch block nb, #batch tiles, lane tile ts, #lane tiles)."""
    block_budget = 3 << 20   # bytes per (nb, C, ts) block; x4 (in+out, double-buffered)
                             # => <= 12 MiB VMEM, inside default scoped VMEM on v5e/v6e/v7x.
    target_block = 2 << 20   # aim for >= ~2 MiB per block to amortize ~0.35 us step overhead.
    min_steps = 4            # keep >= ~4 grid steps when affordable (v7x megacore, pipelining).

    bpl = C * itemsize           # bytes per spatial lane across all channels
    full_bytes = S * bpl         # one batch element, all channels

    # ---- lane (spatial) tile ----
    if full_bytes <= block_budget:
        ts, ns = S, 1            # full spatial extent (always layout-legal)
    else:
        max_ts = max(128, (block_budget // bpl) // 128 * 128)
        if S % 128 == 0:
            b128 = S // 128
            k = pl.cdiv(S, max_ts)
            while b128 % k:      # smallest tile count whose tile evenly divides S
                k += 1
            ts = S // k          # multiple of 128 -> no masked partial last block
        else:
            ts = max_ts          # ragged spatial extent -> one partial last block
        ns = pl.cdiv(S, ts)

    # ---- batch folding (only when one batch element under-fills a block) ----
    nb = 1
    if ns == 1 and N > 1 and full_bytes < target_block:
        nb = min(N, max(1, block_budget // full_bytes))
        # Don't collapse a big batch into 1-2 giant steps: keep >= min_steps steps
        # as long as each step still moves >= ~1 MiB.
        if N >= min_steps and (N // min_steps) * full_bytes >= target_block // 2:
            nb = min(nb, N // min_steps)
        nb = max(1, nb)
    nbt = pl.cdiv(N, nb)
    return nb, nbt, ts, ns


def norm_relu_forward(x, bias, enable):
    """x: [N, C, X, Y, Z]; bias: [nbias] float32 (may be size 0)."""
    N, C = x.shape[0], x.shape[1]
    assert C == sum(d for d, _ in enable)
    nbias = sum(1 for _, on in enable if on)
    if nbias == 0:
        return x                                                 # module returns input as-is

    S = 1
    for s in x.shape[2:]:
        S *= s
    x3 = x.reshape(N, C, S)                                      # free reshape, native layout

    nb, nbt, ts, ns = _plan_tiles(N, C, S, x.dtype.itemsize)

    kernel = functools.partial(_norm_relu_kernel, enable=tuple(enable))

    out3 = pl.pallas_call(
        kernel,
        out_shape=jax.ShapeDtypeStruct((N, C, S), x.dtype),
        grid_spec=pltpu.PrefetchScalarGridSpec(
            num_scalar_prefetch=0,
            grid=(nbt, ns),
            in_specs=[
                pl.BlockSpec(memory_space=pltpu.MemorySpace.SMEM),         # bias (whole, SMEM)
                pl.BlockSpec((nb, C, ts), lambda bi, si: (bi, 0, si)),     # x block
            ],
            out_specs=pl.BlockSpec((nb, C, ts), lambda bi, si: (bi, 0, si)),
        ),
        compiler_params=pltpu.CompilerParams(
            dimension_semantics=("parallel", "parallel")),
    )(bias, x3)

    return out3.reshape(x.shape)


def norm_relu_reference(x, bias, enable):
    """Pure-JAX reference mirroring the PyTorch module."""
    xs = []
    begin1 = 0
    begin2 = 0
    for d, on in enable:
        xg = x[:, begin1:begin1 + d]
        if on:
            b = bias[begin2]
            norm = jnp.sqrt(jnp.sum(xg * xg, axis=1)) + 1e-8      # [N, X, Y, Z]
            newnorm = jnp.maximum(norm - b, 0.0)
            ratio = (newnorm / norm)[:, None]                     # [N, 1, X, Y, Z]
            xg = xg * ratio
            begin2 += 1
        xs.append(xg)
        begin1 += d
    return jnp.concatenate(xs, axis=1)


if __name__ == "__main__":
    key = jax.random.PRNGKey(0)

    configs = [
        # (enable, input shape [N, C, X, Y, Z])
        ([(2, True), (1, False), (4, True)], (2, 7, 8, 8, 8)),      # tiny: single fat block
        ([(2, True), (1, False), (4, True)], (9, 7, 32, 32, 32)),   # batch folding + partial batch block
        ([(16, True), (16, False)], (2, 32, 32, 32, 32)),           # lane-tiled (ns > 1), big disabled group
    ]

    for enable, shape in configs:
        C_total = sum(d for d, _ in enable)
        assert shape[1] == C_total
        nbias = sum(1 for _, on in enable if on)

        # reset_parameters sets bias to 0.1.
        bias = jnp.full((nbias,), 0.1, dtype=jnp.float32)

        key, sub = jax.random.split(key)
        x = jax.random.normal(sub, shape, dtype=jnp.float32)

        out = jax.block_until_ready(norm_relu_forward(x, bias, enable))
        ref = norm_relu_reference(x, bias, enable)

        assert out.shape == x.shape
        # atol absorbs the worst-case deviation of the rsqrt-fused ratio (bounded by
        # ~b * rsqrt-ulp near the ReLU knee); away from the knee agreement is ~1e-7.
        assert jnp.allclose(out, ref, atol=3e-5, rtol=1e-5), f"mismatch vs reference for {shape}"

    print("KERNEL_OK")
</pallas_src>

<mosaic_0001>
module attributes {stable_mosaic.version = 11 : i64} {
  func.func @_norm_relu_kernel(%arg0: i32, %arg1: i32, %arg2: memref<2xf32, #tpu.memory_space<smem>>, %arg3: memref<2x7x512xf32, #tpu.memory_space<vmem>>, %arg4: memref<2x7x512xf32, #tpu.memory_space<vmem>>) attributes {dimension_semantics = [#tpu.dimension_semantics<parallel>, #tpu.dimension_semantics<parallel>], iteration_bounds = array<i64: 1, 1>, scalar_prefetch = 0 : i64, scratch_operands = 0 : i64, tpu.core_type = #tpu.core_type<tc>, window_params = [{transform_indices = @transform_0, window_bounds = array<i64: 2>}, {transform_indices = @transform_1, window_bounds = array<i64: 2, 7, 512>}, {transform_indices = @transform_2, window_bounds = array<i64: 2, 7, 512>}]} {
    %c0 = arith.constant 0 : index
    %c0_0 = arith.constant 0 : index
    %c0_1 = arith.constant 0 : index
    %0 = vector.load %arg3[%c0, %c0_0, %c0_1] : memref<2x7x512xf32, #tpu.memory_space<vmem>>, vector<2x2x512xf32>
    %c0_2 = arith.constant 0 : index
    %1 = memref.load %arg2[%c0_2] : memref<2xf32, #tpu.memory_space<smem>>
    %2 = arith.mulf %0, %0 : vector<2x2x512xf32>
    %cst = arith.constant dense<0.000000e+00> : vector<2x512xf32>
    %3 = vector.multi_reduction <add>, %2, %cst [1] : vector<2x2x512xf32> to vector<2x512xf32>
    %4 = vector.shape_cast %3 : vector<2x512xf32> to vector<2x1x512xf32>
    %cst_3 = arith.constant 1.000000e-16 : f32
    %5 = vector.broadcast %cst_3 : f32 to vector<2x1x512xf32>
    %6 = arith.addf %4, %5 : vector<2x1x512xf32>
    %7 = math.rsqrt %6 : vector<2x1x512xf32>
    %8 = vector.broadcast %1 : f32 to vector<2x1x512xf32>
    %9 = arith.mulf %8, %7 : vector<2x1x512xf32>
    %cst_4 = arith.constant 1.000000e+00 : f32
    %10 = vector.broadcast %cst_4 : f32 to vector<2x1x512xf32>
    %11 = arith.subf %10, %9 : vector<2x1x512xf32>
    %cst_5 = arith.constant 0.000000e+00 : f32
    %12 = vector.broadcast %cst_5 : f32 to vector<2x1x512xf32>
    %13 = arith.maximumf %11, %12 : vector<2x1x512xf32>
    %14 = vector.broadcast %13 : vector<2x1x512xf32> to vector<2x2x512xf32>
    %15 = arith.mulf %0, %14 : vector<2x2x512xf32>
    %c0_6 = arith.constant 0 : index
    %c0_7 = arith.constant 0 : index
    %c0_8 = arith.constant 0 : index
    %16 = vector.load %arg4[%c0_6, %c0_7, %c0_8] : memref<2x7x512xf32, #tpu.memory_space<vmem>>, vector<2x2x512xf32>
    tpu.vector_store %arg4[%c0_6, %c0_7, %c0_8], %15 {strides = array<i32>} : memref<2x7x512xf32, #tpu.memory_space<vmem>>, vector<2x2x512xf32>,
    %c0_9 = arith.constant 0 : index
    %c2 = arith.constant 2 : index
    %c0_10 = arith.constant 0 : index
    %17 = vector.load %arg3[%c0_9, %c2, %c0_10] : memref<2x7x512xf32, #tpu.memory_space<vmem>>, vector<2x1x512xf32>
    %c0_11 = arith.constant 0 : index
    %c2_12 = arith.constant 2 : index
    %c0_13 = arith.constant 0 : index
    %18 = vector.load %arg4[%c0_11, %c2_12, %c0_13] : memref<2x7x512xf32, #tpu.memory_space<vmem>>, vector<2x1x512xf32>
    tpu.vector_store %arg4[%c0_11, %c2_12, %c0_13], %17 {strides = array<i32>} : memref<2x7x512xf32, #tpu.memory_space<vmem>>, vector<2x1x512xf32>,
    %c0_14 = arith.constant 0 : index
    %c3 = arith.constant 3 : index
    %c0_15 = arith.constant 0 : index
    %19 = vector.load %arg3[%c0_14, %c3, %c0_15] : memref<2x7x512xf32, #tpu.memory_space<vmem>>, vector<2x4x512xf32>
    %c1 = arith.constant 1 : index
    %20 = memref.load %arg2[%c1] : memref<2xf32, #tpu.memory_space<smem>>
    %21 = arith.mulf %19, %19 : vector<2x4x512xf32>
    %cst_16 = arith.constant dense<0.000000e+00> : vector<2x512xf32>
    %22 = vector.multi_reduction <add>, %21, %cst_16 [1] : vector<2x4x512xf32> to vector<2x512xf32>
    %23 = vector.shape_cast %22 : vector<2x512xf32> to vector<2x1x512xf32>
    %cst_17 = arith.constant 1.000000e-16 : f32
    %24 = vector.broadcast %cst_17 : f32 to vector<2x1x512xf32>
    %25 = arith.addf %23, %24 : vector<2x1x512xf32>
    %26 = math.rsqrt %25 : vector<2x1x512xf32>
    %27 = vector.broadcast %20 : f32 to vector<2x1x512xf32>
    %28 = arith.mulf %27, %26 : vector<2x1x512xf32>
    %cst_18 = arith.constant 1.000000e+00 : f32
    %29 = vector.broadcast %cst_18 : f32 to vector<2x1x512xf32>
    %30 = arith.subf %29, %28 : vector<2x1x512xf32>
    %cst_19 = arith.constant 0.000000e+00 : f32
    %31 = vector.broadcast %cst_19 : f32 to vector<2x1x512xf32>
    %32 = arith.maximumf %30, %31 : vector<2x1x512xf32>
    %33 = vector.broadcast %32 : vector<2x1x512xf32> to vector<2x4x512xf32>
    %34 = arith.mulf %19, %33 : vector<2x4x512xf32>
    %c0_20 = arith.constant 0 : index
    %c3_21 = arith.constant 3 : index
    %c0_22 = arith.constant 0 : index
    %35 = vector.load %arg4[%c0_20, %c3_21, %c0_22] : memref<2x7x512xf32, #tpu.memory_space<vmem>>, vector<2x4x512xf32>
    tpu.vector_store %arg4[%c0_20, %c3_21, %c0_22], %34 {strides = array<i32>} : memref<2x7x512xf32, #tpu.memory_space<vmem>>, vector<2x4x512xf32>,
    return
  }
  func.func @transform_0(%arg0: i32, %arg1: i32) -> i32 {
    %c0_i32 = arith.constant 0 : i32
    %c0_i32_0 = arith.constant 0 : i32
    return %c0_i32 : i32
  }
  func.func @transform_1(%arg0: i32, %arg1: i32) -> (i32, i32, i32) {
    %c0_i32 = arith.constant 0 : i32
    %c0_i32_0 = arith.constant 0 : i32
    return %arg0, %c0_i32, %arg1 : i32, i32, i32
  }
  func.func @transform_2(%arg0: i32, %arg1: i32) -> (i32, i32, i32) {
    %c0_i32 = arith.constant 0 : i32
    %c0_i32_0 = arith.constant 0 : i32
    return %arg0, %c0_i32, %arg1 : i32, i32, i32
  }
}

</mosaic_0001>

<llo_original>
// kernel: tpu_custom_call.1
$region0: #{tpu_custom_call.1}
  #allocation0 [shape = 'u32[]', space=smem, size = 0x4, offset = 0x4, fixed_abs, tag = 'smem constant byte address 0x4 - core index']
  #allocation1 [shape = 'u32[144,128]{1,0:T(1,128)}', space=vmem, size = 0x12000, scoped, tag = 'internal scratch']
  %s0 = inlined_call_operand.vmem [shape: f32[2], index: 0, kind: input, shape index: {}]
  %s1 = inlined_call_operand.vmem [shape: f32[2,7,512], index: 1, kind: input, shape index: {}]
  %s2 = inlined_call_operand.vmem [shape: f32[2,7,512], index: 2, kind: output, shape index: {}]
  %s3 = sld [smem:[#allocation0]]
  $region22: #{tpu_custom_call.1} parent=0
    _
  %s5 = ssub.s32 1, %s3
  %s6 = scalar_select 0, %s5, %s3
  $region1: #{tpu_custom_call.1} parent=0
    #allocation2 [shape = 'u8[512]{0}', space=smem, size = 0x200, scoped, tag = 'input window, operand 0, single buffered']
    #allocation3 [shape = 's32[1]{0}', space=sflag, size = 0x4, scoped, tag = 'scoped memory for tpu_custom_call.1']
    %7 = vsyncpa [#allocation3], 0
    // Predicated region
    $region2: #{tpu_custom_call.1} parent=1 // pred_check
      _
    $region3: #{tpu_custom_call.1} parent=1 // pred_check_branch
      %9 = sbr.rel (0) target = $region5
    $region4: #{tpu_custom_call.1} parent=1 // pred_region
      %s11 = ssub.s32 16, 16
      %12 = vsyncadd [#allocation3], %s11
      %s14 = sshll.u32 %s0, 4
      %s15 = int_to_ptr.vmem [resolvable:$true] %s14
      %17 = dma.vmem_to_smem %s15, 16, [#allocation2], [#allocation3]
    $region5: #{tpu_custom_call.1} parent=1 // pred_fallthru
      _
    // Predicated region
    $region6: #{tpu_custom_call.1} parent=1 // pred_check
      _
    $region7: #{tpu_custom_call.1} parent=1 // pred_check_branch
      %19 = sbr.rel (0) target = $region9
    $region8: #{tpu_custom_call.1} parent=1 // pred_region
      _
    $region9: #{tpu_custom_call.1} parent=1 // pred_fallthru
      _
    // Predicated region
    $region10: #{tpu_custom_call.1} parent=1 // pred_check
      _
    $region11: #{tpu_custom_call.1} parent=1 // pred_check_branch
      %21 = sbr.rel (0) target = $region13
    $region12: #{tpu_custom_call.1} parent=1 // pred_region
      %22 = dma.done [#allocation3], 16
    $region13: #{tpu_custom_call.1} parent=1 // pred_fallthru
      _
    %23 = sfence
    %v24 = vld [vmem:[%s1] sm:$0x3]
    %v25 = vld [vmem:[%s1 + $0x8] sm:$0x3]
    %v26 = vld [vmem:[%s1 + $0x10] sm:$0x3]
    %v27 = vld [vmem:[%s1 + $0x18] sm:$0x3]
    %v28 = vld [vmem:[%s1 + $0x20] sm:$0x3]
    %v29 = vld [vmem:[%s1 + $0x28] sm:$0x3]
    %v30 = vld [vmem:[%s1 + $0x30] sm:$0x3]
    %v31 = vld [vmem:[%s1 + $0x38] sm:$0x3]
    %s32 = sld [smem:[#allocation2]]
    %v33 = vmul.f32 %v24, %v24
    %v34 = vmul.f32 %v25, %v25
    %v35 = vmul.f32 %v26, %v26
    %v36 = vmul.f32 %v27, %v27
    %v37 = vmul.f32 %v28, %v28
    %v38 = vmul.f32 %v29, %v29
    %v39 = vmul.f32 %v30, %v30
    %v40 = vmul.f32 %v31, %v31
    %vm41 = vcmask 1041408
    %v42 = vsel %vm41, %v33, 0.0
    %v43 = vrot.slane %v42, 4
    %v44 = vadd.f32 %v42, %v43
    %v45 = vrot.slane %v44, 2
    %v46 = vadd.f32 %v44, %v45
    %v47 = vrot.slane %v46, 1
    %v48 = vadd.f32 %v46, %v47
    %v49 = vsel %vm41, %v34, 0.0
    %v50 = vrot.slane %v49, 4
    %v51 = vadd.f32 %v49, %v50
    %v52 = vrot.slane %v51, 2
    %v53 = vadd.f32 %v51, %v52
    %v54 = vrot.slane %v53, 1
    %v55 = vadd.f32 %v53, %v54
    %v56 = vsel %vm41, %v35, 0.0
    %v57 = vrot.slane %v56, 4
    %v58 = vadd.f32 %v56, %v57
    %v59 = vrot.slane %v58, 2
    %v60 = vadd.f32 %v58, %v59
    %v61 = vrot.slane %v60, 1
    %v62 = vadd.f32 %v60, %v61
    %v63 = vsel %vm41, %v36, 0.0
    %v64 = vrot.slane %v63, 4
    %v65 = vadd.f32 %v63, %v64
    %v66 = vrot.slane %v65, 2
    %v67 = vadd.f32 %v65, %v66
    %v68 = vrot.slane %v67, 1
    %v69 = vadd.f32 %v67, %v68
    %v70 = vsel %vm41, %v37, 0.0
    %v71 = vrot.slane %v70, 4
    %v72 = vadd.f32 %v70, %v71
    %v73 = vrot.slane %v72, 2
    %v74 = vadd.f32 %v72, %v73
    %v75 = vrot.slane %v74, 1
    %v76 = vadd.f32 %v74, %v75
    %v77 = vsel %vm41, %v38, 0.0
    %v78 = vrot.slane %v77, 4
    %v79 = vadd.f32 %v77, %v78
    %v80 = vrot.slane %v79, 2
    %v81 = vadd.f32 %v79, %v80
    %v82 = vrot.slane %v81, 1
    %v83 = vadd.f32 %v81, %v82
    %v84 = vsel %vm41, %v39, 0.0
    %v85 = vrot.slane %v84, 4
    %v86 = vadd.f32 %v84, %v85
    %v87 = vrot.slane %v86, 2
    %v88 = vadd.f32 %v86, %v87
    %v89 = vrot.slane %v88, 1
    %v90 = vadd.f32 %v88, %v89
    %v91 = vsel %vm41, %v40, 0.0
    %v92 = vrot.slane %v91, 4
    %v93 = vadd.f32 %v91, %v92
    %v94 = vrot.slane %v93, 2
    %v95 = vadd.f32 %v93, %v94
    %v96 = vrot.slane %v95, 1
    %v97 = vadd.f32 %v95, %v96
    %v98 = vadd.f32 %v48, 1e-16
    %v99 = vadd.f32 %v55, 1e-16
    %v100 = vadd.f32 %v62, 1e-16
    %v101 = vadd.f32 %v69, 1e-16
    %v102 = vadd.f32 %v76, 1e-16
    %v103 = vadd.f32 %v83, 1e-16
    %v104 = vadd.f32 %v90, 1e-16
    %v105 = vadd.f32 %v97, 1e-16
    %v106 = vrsqrt.pop %v98
    %v107 = vrsqrt.pop %v99
    %v108 = vrsqrt.pop %v100
    %v109 = vrsqrt.pop %v101
    %v110 = vrsqrt.pop %v102
    %v111 = vrsqrt.pop %v103
    %v112 = vrsqrt.pop %v104
    %v113 = vrsqrt.pop %v105
    %v114 = vstv %s32
    %v115 = vmul.f32 %v114, %v106
    %v116 = vmul.f32 %v114, %v107
    %v117 = vmul.f32 %v114, %v108
    %v118 = vmul.f32 %v114, %v109
    %v119 = vmul.f32 %v114, %v110
    %v120 = vmul.f32 %v114, %v111
    %v121 = vmul.f32 %v114, %v112
    %v122 = vmul.f32 %v114, %v113
    %v123 = vsub.f32 1.0, %v115
    %v124 = vsub.f32 1.0, %v116
    %v125 = vsub.f32 1.0, %v117
    %v126 = vsub.f32 1.0, %v118
    %v127 = vsub.f32 1.0, %v119
    %v128 = vsub.f32 1.0, %v120
    %v129 = vsub.f32 1.0, %v121
    %v130 = vsub.f32 1.0, %v122
    %v131 = vmax.f32 %v123, 0.0
    %v132 = vmax.f32 %v124, 0.0
    %v133 = vmax.f32 %v125, 0.0
    %v134 = vmax.f32 %v126, 0.0
    %v135 = vmax.f32 %v127, 0.0
    %v136 = vmax.f32 %v128, 0.0
    %v137 = vmax.f32 %v129, 0.0
    %v138 = vmax.f32 %v130, 0.0
    %v139 = vmul.f32 %v24, %v131
    %v140 = vmul.f32 %v25, %v132
    %v141 = vmul.f32 %v26, %v133
    %v142 = vmul.f32 %v27, %v134
    %v143 = vmul.f32 %v28, %v135
    %v144 = vmul.f32 %v29, %v136
    %v145 = vmul.f32 %v30, %v137
    %v146 = vmul.f32 %v31, %v138
    %147 = vst [vmem:[%s2] sm:$0x3] %v139
    %148 = vst [vmem:[%s2 + $0x8] sm:$0x3] %v140
    %149 = vst [vmem:[%s2 + $0x10] sm:$0x3] %v141
    %150 = vst [vmem:[%s2 + $0x18] sm:$0x3] %v142
    %151 = vst [vmem:[%s2 + $0x20] sm:$0x3] %v143
    %152 = vst [vmem:[%s2 + $0x28] sm:$0x3] %v144
    %153 = vst [vmem:[%s2 + $0x30] sm:$0x3] %v145
    %154 = vst [vmem:[%s2 + $0x38] sm:$0x3] %v146
    %s155 = scalar_lea.vmem %s1, 2
    %v156 = vld [vmem:[%s155] ss:$8 sm:$0xf]
    %s157 = scalar_lea.vmem %s1, 34
    %v158 = vld [vmem:[%s157] ss:$8 sm:$0xf]
    %v159 = vlaneseq
    %vm160 = vcmp.ge.s32.totalorder %v159, 0
    %vm161 = vcmp.lt.s32.totalorder %v159, 512
    %vm162 = vmand %vm160, %vm161
    %s163 = scalar_lea.vmem %s2, 2
    %164 = vst.msk [vmem:[%s163] ss:$8 sm:$0xf] %vm162, %v156
    %165 = vst.msk [vmem:[%s163] ss:$8 sm:$0x0] %vm162, %v156
    %s166 = scalar_lea.vmem %s2, 34
    %167 = vst.msk [vmem:[%s166] ss:$8 sm:$0xf] %vm162, %v158
    %168 = vst.msk [vmem:[%s166] ss:$8 sm:$0x0] %vm162, %v158
    %v169 = vld [vmem:[%s1] sm:$0x78]
    %v170 = vld [vmem:[%s1 + $0x8] sm:$0x78]
    %v171 = vld [vmem:[%s1 + $0x10] sm:$0x78]
    %v172 = vld [vmem:[%s1 + $0x18] sm:$0x78]
    %v173 = vld [vmem:[%s1 + $0x20] sm:$0x78]
    %v174 = vld [vmem:[%s1 + $0x28] sm:$0x78]
    %v175 = vld [vmem:[%s1 + $0x30] sm:$0x78]
    %v176 = vld [vmem:[%s1 + $0x38] sm:$0x78]
    %s177 = sld [smem:[#allocation2 + $0x1]]
    %v178 = vmul.f32 %v169, %v169
    %v179 = vmul.f32 %v170, %v170
    %v180 = vmul.f32 %v171, %v171
    %v181 = vmul.f32 %v172, %v172
    %v182 = vmul.f32 %v173, %v173
    %v183 = vmul.f32 %v174, %v174
    %v184 = vmul.f32 %v175, %v175
    %v185 = vmul.f32 %v176, %v176
    %v194 = vrot.slane %v178, 3
    %v195 = vrot.slane %v179, 3
    %v196 = vrot.slane %v180, 3
    %v197 = vrot.slane %v181, 3
    %v198 = vrot.slane %v182, 3
    %v199 = vrot.slane %v183, 3
    %v200 = vrot.slane %v184, 3
    %v201 = vrot.slane %v185, 3
    %vm210 = vcmask 1043456
    %v211 = vsel %vm210, %v194, 0.0
    %v212 = vrot.slane %v211, 4
    %v213 = vadd.f32 %v211, %v212
    %v214 = vrot.slane %v213, 2
    %v215 = vadd.f32 %v213, %v214
    %v216 = vrot.slane %v215, 1
    %v217 = vadd.f32 %v215, %v216
    %v218 = vsel %vm210, %v195, 0.0
    %v219 = vrot.slane %v218, 4
    %v220 = vadd.f32 %v218, %v219
    %v221 = vrot.slane %v220, 2
    %v222 = vadd.f32 %v220, %v221
    %v223 = vrot.slane %v222, 1
    %v224 = vadd.f32 %v222, %v223
    %v225 = vsel %vm210, %v196, 0.0
    %v226 = vrot.slane %v225, 4
    %v227 = vadd.f32 %v225, %v226
    %v228 = vrot.slane %v227, 2
    %v229 = vadd.f32 %v227, %v228
    %v230 = vrot.slane %v229, 1
    %v231 = vadd.f32 %v229, %v230
    %v232 = vsel %vm210, %v197, 0.0
    %v233 = vrot.slane %v232, 4
    %v234 = vadd.f32 %v232, %v233
    %v235 = vrot.slane %v234, 2
    %v236 = vadd.f32 %v234, %v235
    %v237 = vrot.slane %v236, 1
    %v238 = vadd.f32 %v236, %v237
    %v239 = vsel %vm210, %v198, 0.0
    %v240 = vrot.slane %v239, 4
    %v241 = vadd.f32 %v239, %v240
    %v242 = vrot.slane %v241, 2
    %v243 = vadd.f32 %v241, %v242
    %v244 = vrot.slane %v243, 1
    %v245 = vadd.f32 %v243, %v244
    %v246 = vsel %vm210, %v199, 0.0
    %v247 = vrot.slane %v246, 4
    %v248 = vadd.f32 %v246, %v247
    %v249 = vrot.slane %v248, 2
    %v250 = vadd.f32 %v248, %v249
    %v251 = vrot.slane %v250, 1
    %v252 = vadd.f32 %v250, %v251
    %v253 = vsel %vm210, %v200, 0.0
    %v254 = vrot.slane %v253, 4
    %v255 = vadd.f32 %v253, %v254
    %v256 = vrot.slane %v255, 2
    %v257 = vadd.f32 %v255, %v256
    %v258 = vrot.slane %v257, 1
    %v259 = vadd.f32 %v257, %v258
    %v260 = vsel %vm210, %v201, 0.0
    %v261 = vrot.slane %v260, 4
    %v262 = vadd.f32 %v260, %v261
    %v263 = vrot.slane %v262, 2
    %v264 = vadd.f32 %v262, %v263
    %v265 = vrot.slane %v264, 1
    %v266 = vadd.f32 %v264, %v265
    %v267 = vadd.f32 %v217, 1e-16
    %v268 = vadd.f32 %v224, 1e-16
    %v269 = vadd.f32 %v231, 1e-16
    %v270 = vadd.f32 %v238, 1e-16
    %v271 = vadd.f32 %v245, 1e-16
    %v272 = vadd.f32 %v252, 1e-16
    %v273 = vadd.f32 %v259, 1e-16
    %v274 = vadd.f32 %v266, 1e-16
    %v275 = vrsqrt.pop %v267
    %v276 = vrsqrt.pop %v268
    %v277 = vrsqrt.pop %v269
    %v278 = vrsqrt.pop %v270
    %v279 = vrsqrt.pop %v271
    %v280 = vrsqrt.pop %v272
    %v281 = vrsqrt.pop %v273
    %v282 = vrsqrt.pop %v274
    %v283 = vstv %s177
    %v284 = vmul.f32 %v283, %v275
    %v285 = vmul.f32 %v283, %v276
    %v286 = vmul.f32 %v283, %v277
    %v287 = vmul.f32 %v283, %v278
    %v288 = vmul.f32 %v283, %v279
    %v289 = vmul.f32 %v283, %v280
    %v290 = vmul.f32 %v283, %v281
    %v291 = vmul.f32 %v283, %v282
    %v292 = vsub.f32 1.0, %v284
    %v293 = vsub.f32 1.0, %v285
    %v294 = vsub.f32 1.0, %v286
    %v295 = vsub.f32 1.0, %v287
    %v296 = vsub.f32 1.0, %v288
    %v297 = vsub.f32 1.0, %v289
    %v298 = vsub.f32 1.0, %v290
    %v299 = vsub.f32 1.0, %v291
    %v300 = vmax.f32 %v292, 0.0
    %v301 = vmax.f32 %v293, 0.0
    %v302 = vmax.f32 %v294, 0.0
    %v303 = vmax.f32 %v295, 0.0
    %v304 = vmax.f32 %v296, 0.0
    %v305 = vmax.f32 %v297, 0.0
    %v306 = vmax.f32 %v298, 0.0
    %v307 = vmax.f32 %v299, 0.0
    %v308 = vmul.f32 %v169, %v300
    %v309 = vmul.f32 %v170, %v301
    %v310 = vmul.f32 %v171, %v302
    %v311 = vmul.f32 %v172, %v303
    %v312 = vmul.f32 %v173, %v304
    %v313 = vmul.f32 %v174, %v305
    %v314 = vmul.f32 %v175, %v306
    %v315 = vmul.f32 %v176, %v307
    %316 = vst [vmem:[%s2] sm:$0x78] %v308
    %317 = vst [vmem:[%s2 + $0x8] sm:$0x78] %v309
    %318 = vst [vmem:[%s2 + $0x10] sm:$0x78] %v310
    %319 = vst [vmem:[%s2 + $0x18] sm:$0x78] %v311
    %320 = vst [vmem:[%s2 + $0x20] sm:$0x78] %v312
    %321 = vst [vmem:[%s2 + $0x28] sm:$0x78] %v313
    %322 = vst [vmem:[%s2 + $0x30] sm:$0x78] %v314
    %323 = vst [vmem:[%s2 + $0x38] sm:$0x78] %v315
    // Predicated region
    $region14: #{tpu_custom_call.1} parent=1 // pred_check
      _
    $region15: #{tpu_custom_call.1} parent=1 // pred_check_branch
      %325 = sbr.rel (0) target = $region17
    $region16: #{tpu_custom_call.1} parent=1 // pred_region
      _
    $region17: #{tpu_custom_call.1} parent=1 // pred_fallthru
      _
    // Predicated region
    $region18: #{tpu_custom_call.1} parent=1 // pred_check
      _
    $region19: #{tpu_custom_call.1} parent=1 // pred_check_branch
      %327 = sbr.rel (0) target = $region21
    $region20: #{tpu_custom_call.1} parent=1 // pred_region
      _
    $region21: #{tpu_custom_call.1} parent=1 // pred_fallthru
      _
    %328 = vsyncpa [#allocation3], 1

</llo_original>
